<compile_context>
chip_gen: v6e
topology: v6e:2x2x1
jax: 0.10.0
libtpu: 0.0.40
codegen_flags: <defaults>
</compile_context>

<pallas_src>
import functools

import jax
import jax.numpy as jnp
from jax.experimental import pallas as pl
from jax.experimental.pallas import tpu as pltpu


def _round_up(x, m):
    return ((x + m - 1) // m) * m


def _default_tile_n():
    """Per-generation token-tile default (keeps the streamed-weight path MXU-bound)."""
    try:
        kind = jax.devices()[0].device_kind.lower()
    except Exception:
        kind = ""
    if "v5 lite" in kind or "v5e" in kind or "v5litepod" in kind:
        return 256          # v5e: ~0.82 TB/s HBM, 197 TF/s -> residency preferred
    return 512              # v6e / v7x and newer


def _vmem_limit_bytes():
    """Scoped-VMEM request: ~75% of physical (≈48 MiB v7x, ≈96 MiB v5e/v6e)."""
    cap = None
    try:
        cap = int(pltpu.get_tpu_info().vmem_capacity_bytes)
    except Exception:
        cap = None
    if cap is None:
        try:
            kind = jax.devices()[0].device_kind.lower()
        except Exception:
            kind = ""
        cap = 64 * 1024 * 1024 if "v7" in kind else 128 * 1024 * 1024
    return max(32 * 1024 * 1024, (cap * 3) // 4)


def _fixed_vmem_bytes(tile, d_model, act_itemsize):
    # x + out token tiles (double-buffered), f32 accumulator, small param rows.
    return (2 * 2 * tile * d_model * act_itemsize
            + tile * d_model * 4
            + 3 * 2 * max(d_model, 128) * 4)


def _chunk_vmem_bytes(tile, tile_h, d_model, w_itemsize, bufs):
    return (bufs * tile_h * d_model * w_itemsize * 2          # W1 chunk + W2 chunk
            + bufs * max(tile_h, 128) * 4                     # b1 chunk (f32)
            + tile * tile_h * (4 + w_itemsize))               # f32 h chunk + downcast copy


def _choose_tile_h(tile, d_model, d_hid, act_itemsize, w_itemsize, budget):
    avail = budget - _fixed_vmem_bytes(tile, d_model, act_itemsize)
    # Prefer fully-resident weights (single inner grid step, single-buffered).
    if _chunk_vmem_bytes(tile, d_hid, d_model, w_itemsize, bufs=1) <= avail:
        return d_hid
    # Otherwise stream the hidden dim: largest 128-multiple divisor of d_hid that
    # fits with double-buffered weight chunks.
    th = (d_hid // 128) * 128
    while th >= 128:
        if d_hid % th == 0 and _chunk_vmem_bytes(tile, th, d_model, w_itemsize, 2) <= avail:
            return th
        th -= 128
    # TODO(synk): mask partial hidden chunks so non-divisor tile_h is usable; until
    # then fall back to fully-resident weights.
    return d_hid


def _ffn_kernel(x_ref, w1_ref, b1_ref, w2_ref, b2_ref, g_ref, beta_ref,
                o_ref, acc_ref, *, eps):
    j = pl.program_id(1)

    x = x_ref[...]                                            # (tile, d_model), native dtype

    # Linear1 chunk + bias + ReLU fused in f32; single downcast feeding Linear2.
    h = jnp.dot(x, w1_ref[...], preferred_element_type=jnp.float32)
    h = jnp.maximum(h + b1_ref[...], 0.0)                     # (tile, tile_h) f32
    contrib = jnp.dot(h.astype(w2_ref.dtype), w2_ref[...],
                      preferred_element_type=jnp.float32)     # (tile, d_model) f32

    @pl.when(j == 0)
    def _():
        acc_ref[...] = contrib

    @pl.when(j != 0)
    def _():
        acc_ref[...] += contrib

    # TODO(synk): dropout omitted (eval-mode identity; no stochastic mask here).

    @pl.when(j == pl.num_programs(1) - 1)
    def _():
        y = acc_ref[...] + b2_ref[...]
        z = y + x.astype(jnp.float32)                         # residual
        mean = jnp.mean(z, axis=-1, keepdims=True)
        zc = z - mean
        var = jnp.mean(zc * zc, axis=-1, keepdims=True)
        inv = jax.lax.rsqrt(var + eps)
        o_ref[...] = (zc * inv * g_ref[...] + beta_ref[...]).astype(o_ref.dtype)


def positionwise_feedforward(x, w1, b1, w2, b2, gamma, beta,
                             *, eps=1e-6, tile_n=None, tile_h=None):
    """x: (B, S, d_model) -> (B, S, d_model).

    w1: (d_hid, d_model), w2: (d_model, d_hid)  -- PyTorch nn.Linear convention.
    """
    B, S, d_model = x.shape
    d_hid = w1.shape[0]
    N = B * S

    act_itemsize = x.dtype.itemsize
    w_itemsize = w1.dtype.itemsize
    # Sublane pack of the activation dtype: f32 -> 8, bf16 -> 16, int8/fp8 -> 32.
    pack = max(8, 32 // act_itemsize)

    vmem_limit = _vmem_limit_bytes()
    budget = (vmem_limit * 4) // 5

    if tile_n is None:
        tile_n = _default_tile_n()
    tile = _round_up(min(tile_n, _round_up(N, pack)), pack)
    # Shrink the token tile if activations alone would dominate the VMEM budget.
    while tile > 2 * pack and _fixed_vmem_bytes(tile, d_model, act_itemsize) > budget // 2:
        tile = _round_up(tile // 2, pack)
    nt = pl.cdiv(N, tile)
    # Give megacore chips (v7x) at least two token tiles to shard across cores.
    if nt == 1 and N > pack:
        tile = _round_up(pl.cdiv(N, 2), pack)
        nt = pl.cdiv(N, tile)

    if tile_h is None:
        tile_h = _choose_tile_h(tile, d_model, d_hid, act_itemsize, w_itemsize, budget)
    assert d_hid % tile_h == 0, "tile_h must divide d_hid"
    nh = d_hid // tile_h

    x2 = x.reshape(N, d_model)

    # One-time XLA-side transposes to contraction-friendly layout (no in-kernel .T).
    w1t = jnp.transpose(w1)                        # (d_model, d_hid)
    w2t = jnp.transpose(w2)                        # (d_hid, d_model)

    # Params as f32 rows: no per-grid-step casts / broadcast re-materialization.
    b1_2 = b1.astype(jnp.float32).reshape(1, d_hid)
    b2_2 = b2.astype(jnp.float32).reshape(1, d_model)
    g_2 = gamma.astype(jnp.float32).reshape(1, d_model)
    be_2 = beta.astype(jnp.float32).reshape(1, d_model)

    # Grid-invariant blocks -> single-buffered to halve their VMEM footprint.
    def _const(shape):
        return pl.BlockSpec(shape, lambda i, j: (0, 0), pipeline_mode=pl.Buffered(1))

    if nh == 1:
        # Weights are grid-invariant (resident): single-buffer them.
        w1_spec = pl.BlockSpec((d_model, tile_h), lambda i, j: (0, j),
                               pipeline_mode=pl.Buffered(1))
        b1_spec = pl.BlockSpec((1, tile_h), lambda i, j: (0, j),
                               pipeline_mode=pl.Buffered(1))
        w2_spec = pl.BlockSpec((tile_h, d_model), lambda i, j: (j, 0),
                               pipeline_mode=pl.Buffered(1))
    else:
        # Streamed weight chunks: keep default double-buffering for overlap.
        w1_spec = pl.BlockSpec((d_model, tile_h), lambda i, j: (0, j))
        b1_spec = pl.BlockSpec((1, tile_h), lambda i, j: (0, j))
        w2_spec = pl.BlockSpec((tile_h, d_model), lambda i, j: (j, 0))

    cost = pl.CostEstimate(
        flops=4 * N * d_model * d_hid + 10 * N * d_model,
        transcendentals=N,
        bytes_accessed=(2 * N * d_model * act_itemsize
                        + 2 * d_model * d_hid * w_itemsize * (1 if nh == 1 else nt)
                        + (d_hid + 3 * d_model) * 4),
    )

    out = pl.pallas_call(
        functools.partial(_ffn_kernel, eps=eps),
        out_shape=jax.ShapeDtypeStruct((N, d_model), x.dtype),
        grid_spec=pltpu.PrefetchScalarGridSpec(
            num_scalar_prefetch=0,
            grid=(nt, nh),
            in_specs=[
                pl.BlockSpec((tile, d_model), lambda i, j: (i, 0)),   # x tile
                w1_spec,                                              # W1^T chunk
                b1_spec,                                              # b1 chunk (f32)
                w2_spec,                                              # W2^T chunk
                _const((1, d_model)),                                 # b2 (f32)
                _const((1, d_model)),                                 # gamma (f32)
                _const((1, d_model)),                                 # beta (f32)
            ],
            out_specs=pl.BlockSpec((tile, d_model), lambda i, j: (i, 0)),
            scratch_shapes=[pltpu.VMEM((tile, d_model), jnp.float32)],
        ),
        compiler_params=pltpu.CompilerParams(
            dimension_semantics=("parallel", "arbitrary"),
            vmem_limit_bytes=vmem_limit,
        ),
        cost_estimate=cost,
    )(x2, w1t, b1_2, w2t, b2_2, g_2, be_2)

    return out.reshape(B, S, d_model)


def _reference(x, w1, b1, w2, b2, gamma, beta, eps=1e-6):
    h = jax.nn.relu(jnp.einsum("bsd,hd->bsh", x, w1) + b1)
    y = jnp.einsum("bsh,dh->bsd", h, w2) + b2
    z = y + x
    mean = jnp.mean(z, axis=-1, keepdims=True)
    var = jnp.mean((z - mean) ** 2, axis=-1, keepdims=True)
    return (z - mean) / jnp.sqrt(var + eps) * gamma + beta


if __name__ == "__main__":
    def make_params(key, d_model, d_hid):
        k1, k2, k3, k4 = jax.random.split(key, 4)
        bound1 = 1.0 / (d_model ** 0.5)
        bound2 = 1.0 / (d_hid ** 0.5)
        w1 = jax.random.uniform(k1, (d_hid, d_model), jnp.float32, -bound1, bound1)
        b1 = jax.random.uniform(k2, (d_hid,), jnp.float32, -bound1, bound1)
        w2 = jax.random.uniform(k3, (d_model, d_hid), jnp.float32, -bound2, bound2)
        b2 = jax.random.uniform(k4, (d_model,), jnp.float32, -bound2, bound2)
        gamma = jnp.ones((d_model,), jnp.float32)
        beta = jnp.zeros((d_model,), jnp.float32)
        return w1, b1, w2, b2, gamma, beta

    keys = jax.random.split(jax.random.PRNGKey(0), 6)

    # Test 1: base case (weights resident, 2 token tiles).
    B, S, d_model, d_hid = 2, 8, 32, 64
    x = jax.random.normal(keys[0], (B, S, d_model), dtype=jnp.float32)
    params = make_params(keys[1], d_model, d_hid)
    out = jax.block_until_ready(positionwise_feedforward(x, *params))
    ref = _reference(x, *params)
    assert out.shape == (B, S, d_model)
    assert jnp.allclose(out, ref, atol=1e-5, rtol=1e-5), "mismatch vs reference (test 1)"

    # Test 2: token count not a multiple of the tile (partial last block, no pad).
    x2 = jax.random.normal(keys[2], (2, 7, d_model), dtype=jnp.float32)
    params2 = make_params(keys[3], d_model, d_hid)
    out2 = jax.block_until_ready(positionwise_feedforward(x2, *params2))
    ref2 = _reference(x2, *params2)
    assert jnp.allclose(out2, ref2, atol=1e-5, rtol=1e-5), "mismatch vs reference (test 2)"

    # Test 3: forced d_hid streaming (two hidden chunks + f32 accumulator path).
    d_model3, d_hid3 = 128, 256
    x3 = jax.random.normal(keys[4], (2, 8, d_model3), dtype=jnp.float32)
    params3 = make_params(keys[5], d_model3, d_hid3)
    out3 = jax.block_until_ready(positionwise_feedforward(x3, *params3, tile_h=128))
    ref3 = _reference(x3, *params3)
    assert jnp.allclose(out3, ref3, atol=1e-4, rtol=1e-4), "mismatch vs reference (test 3)"

    print("KERNEL_OK")
</pallas_src>

<mosaic_0001>
module attributes {stable_mosaic.version = 11 : i64} {
  func.func @_ffn_kernel(%arg0: i32, %arg1: i32, %arg2: memref<8x32xf32, #tpu.memory_space<vmem>>, %arg3: memref<32x64xf32, #tpu.memory_space<vmem>>, %arg4: memref<1x64xf32, #tpu.memory_space<vmem>>, %arg5: memref<64x32xf32, #tpu.memory_space<vmem>>, %arg6: memref<1x32xf32, #tpu.memory_space<vmem>>, %arg7: memref<1x32xf32, #tpu.memory_space<vmem>>, %arg8: memref<1x32xf32, #tpu.memory_space<vmem>>, %arg9: memref<8x32xf32, #tpu.memory_space<vmem>>, %arg10: memref<8x32xf32, #tpu.memory_space<vmem>>) attributes {dimension_semantics = [#tpu.dimension_semantics<parallel>, #tpu.dimension_semantics<arbitrary>], iteration_bounds = array<i64: 2, 1>, scalar_prefetch = 0 : i64, scratch_operands = 1 : i64, tpu.core_type = #tpu.core_type<tc>, window_params = [{transform_indices = @transform_0, window_bounds = array<i64: 8, 32>}, {pipeline_mode = #tpu.pipeline_mode<synchronous>, transform_indices = @transform_1, window_bounds = array<i64: 32, 64>}, {pipeline_mode = #tpu.pipeline_mode<synchronous>, transform_indices = @transform_2, window_bounds = array<i64: 1, 64>}, {pipeline_mode = #tpu.pipeline_mode<synchronous>, transform_indices = @transform_3, window_bounds = array<i64: 64, 32>}, {pipeline_mode = #tpu.pipeline_mode<synchronous>, transform_indices = @transform_4, window_bounds = array<i64: 1, 32>}, {pipeline_mode = #tpu.pipeline_mode<synchronous>, transform_indices = @transform_5, window_bounds = array<i64: 1, 32>}, {pipeline_mode = #tpu.pipeline_mode<synchronous>, transform_indices = @transform_6, window_bounds = array<i64: 1, 32>}, {transform_indices = @transform_7, window_bounds = array<i64: 8, 32>}]} {
    %c0 = arith.constant 0 : index
    %c0_0 = arith.constant 0 : index
    %0 = vector.load %arg2[%c0, %c0_0] : memref<8x32xf32, #tpu.memory_space<vmem>>, vector<8x32xf32>
    %c0_1 = arith.constant 0 : index
    %c0_2 = arith.constant 0 : index
    %1 = vector.load %arg3[%c0_1, %c0_2] : memref<32x64xf32, #tpu.memory_space<vmem>>, vector<32x64xf32>
    %cst = arith.constant dense<0.000000e+00> : vector<8x64xf32>
    %2 = tpu.matmul %0, %1, %cst {dimension_numbers = #tpu.dot_dimension_numbers<[1], [0], [0], [1], [0, 0, 1, 1], [], []>} : vector<8x32xf32>, vector<32x64xf32>, vector<8x64xf32> -> vector<8x64xf32>
    %c0_3 = arith.constant 0 : index
    %c0_4 = arith.constant 0 : index
    %3 = vector.load %arg4[%c0_3, %c0_4] : memref<1x64xf32, #tpu.memory_space<vmem>>, vector<1x64xf32>
    %4 = vector.broadcast %3 : vector<1x64xf32> to vector<8x64xf32>
    %5 = arith.addf %2, %4 : vector<8x64xf32>
    %cst_5 = arith.constant 0.000000e+00 : f32
    %6 = vector.broadcast %cst_5 : f32 to vector<8x64xf32>
    %7 = arith.maximumf %5, %6 : vector<8x64xf32>
    %c0_6 = arith.constant 0 : index
    %c0_7 = arith.constant 0 : index
    %8 = vector.load %arg5[%c0_6, %c0_7] : memref<64x32xf32, #tpu.memory_space<vmem>>, vector<64x32xf32>
    %cst_8 = arith.constant dense<0.000000e+00> : vector<8x32xf32>
    %9 = tpu.matmul %7, %8, %cst_8 {dimension_numbers = #tpu.dot_dimension_numbers<[1], [0], [0], [1], [0, 0, 1, 1], [], []>} : vector<8x64xf32>, vector<64x32xf32>, vector<8x32xf32> -> vector<8x32xf32>
    %c0_i32 = arith.constant 0 : i32
    %10 = arith.cmpi eq, %arg1, %c0_i32 : i32
    %11 = arith.extui %10 : i1 to i32
    %c0_i32_9 = arith.constant 0 : i32
    %12 = arith.cmpi ne, %11, %c0_i32_9 : i32
    scf.if %12 {
      %c0_14 = arith.constant 0 : index
      %c0_15 = arith.constant 0 : index
      %19 = vector.load %arg10[%c0_14, %c0_15] : memref<8x32xf32, #tpu.memory_space<vmem>>, vector<8x32xf32>
      tpu.vector_store %arg10[%c0_14, %c0_15], %9 {strides = array<i32>} : memref<8x32xf32, #tpu.memory_space<vmem>>, vector<8x32xf32>,
    } else {
    }
    %c0_i32_10 = arith.constant 0 : i32
    %13 = arith.cmpi ne, %arg1, %c0_i32_10 : i32
    %14 = arith.extui %13 : i1 to i32
    %c0_i32_11 = arith.constant 0 : i32
    %15 = arith.cmpi ne, %14, %c0_i32_11 : i32
    scf.if %15 {
      %c0_14 = arith.constant 0 : index
      %c0_15 = arith.constant 0 : index
      %19 = vector.load %arg10[%c0_14, %c0_15] : memref<8x32xf32, #tpu.memory_space<vmem>>, vector<8x32xf32>
      %20 = arith.addf %19, %9 : vector<8x32xf32>
      %c0_16 = arith.constant 0 : index
      %c0_17 = arith.constant 0 : index
      %21 = vector.load %arg10[%c0_16, %c0_17] : memref<8x32xf32, #tpu.memory_space<vmem>>, vector<8x32xf32>
      tpu.vector_store %arg10[%c0_16, %c0_17], %20 {strides = array<i32>} : memref<8x32xf32, #tpu.memory_space<vmem>>, vector<8x32xf32>,
    } else {
    }
    %c0_i32_12 = arith.constant 0 : i32
    %16 = arith.cmpi eq, %arg1, %c0_i32_12 : i32
    %17 = arith.extui %16 : i1 to i32
    %c0_i32_13 = arith.constant 0 : i32
    %18 = arith.cmpi ne, %17, %c0_i32_13 : i32
    scf.if %18 {
      %c0_14 = arith.constant 0 : index
      %c0_15 = arith.constant 0 : index
      %19 = vector.load %arg10[%c0_14, %c0_15] : memref<8x32xf32, #tpu.memory_space<vmem>>, vector<8x32xf32>
      %c0_16 = arith.constant 0 : index
      %c0_17 = arith.constant 0 : index
      %20 = vector.load %arg6[%c0_16, %c0_17] : memref<1x32xf32, #tpu.memory_space<vmem>>, vector<1x32xf32>
      %21 = vector.broadcast %20 : vector<1x32xf32> to vector<8x32xf32>
      %22 = arith.addf %19, %21 : vector<8x32xf32>
      %23 = arith.addf %22, %0 : vector<8x32xf32>
      %cst_18 = arith.constant dense<0.000000e+00> : vector<8xf32>
      %24 = vector.multi_reduction <add>, %23, %cst_18 [1] : vector<8x32xf32> to vector<8xf32>
      %25 = vector.shape_cast %24 : vector<8xf32> to vector<8x1xf32>
      %cst_19 = arith.constant 3.200000e+01 : f32
      %26 = vector.broadcast %cst_19 : f32 to vector<8x1xf32>
      %27 = arith.divf %25, %26 : vector<8x1xf32>
      %28 = vector.broadcast %27 : vector<8x1xf32> to vector<8x32xf32>
      %29 = arith.subf %23, %28 : vector<8x32xf32>
      %30 = arith.mulf %29, %29 : vector<8x32xf32>
      %cst_20 = arith.constant dense<0.000000e+00> : vector<8xf32>
      %31 = vector.multi_reduction <add>, %30, %cst_20 [1] : vector<8x32xf32> to vector<8xf32>
      %32 = vector.shape_cast %31 : vector<8xf32> to vector<8x1xf32>
      %cst_21 = arith.constant 3.200000e+01 : f32
      %33 = vector.broadcast %cst_21 : f32 to vector<8x1xf32>
      %34 = arith.divf %32, %33 : vector<8x1xf32>
      %cst_22 = arith.constant 9.99999997E-7 : f32
      %35 = vector.broadcast %cst_22 : f32 to vector<8x1xf32>
      %36 = arith.addf %34, %35 : vector<8x1xf32>
      %37 = math.rsqrt %36 : vector<8x1xf32>
      %38 = vector.broadcast %37 : vector<8x1xf32> to vector<8x32xf32>
      %39 = arith.mulf %29, %38 : vector<8x32xf32>
      %c0_23 = arith.constant 0 : index
      %c0_24 = arith.constant 0 : index
      %40 = vector.load %arg7[%c0_23, %c0_24] : memref<1x32xf32, #tpu.memory_space<vmem>>, vector<1x32xf32>
      %41 = vector.broadcast %40 : vector<1x32xf32> to vector<8x32xf32>
      %42 = arith.mulf %39, %41 : vector<8x32xf32>
      %c0_25 = arith.constant 0 : index
      %c0_26 = arith.constant 0 : index
      %43 = vector.load %arg8[%c0_25, %c0_26] : memref<1x32xf32, #tpu.memory_space<vmem>>, vector<1x32xf32>
      %44 = vector.broadcast %43 : vector<1x32xf32> to vector<8x32xf32>
      %45 = arith.addf %42, %44 : vector<8x32xf32>
      %c0_27 = arith.constant 0 : index
      %c0_28 = arith.constant 0 : index
      %46 = vector.load %arg9[%c0_27, %c0_28] : memref<8x32xf32, #tpu.memory_space<vmem>>, vector<8x32xf32>
      tpu.vector_store %arg9[%c0_27, %c0_28], %45 {strides = array<i32>} : memref<8x32xf32, #tpu.memory_space<vmem>>, vector<8x32xf32>,
    } else {
    }
    return
  }
  func.func @transform_0(%arg0: i32, %arg1: i32) -> (i32, i32) {
    %c0_i32 = arith.constant 0 : i32
    %c0_i32_0 = arith.constant 0 : i32
    return %arg0, %c0_i32 : i32, i32
  }
  func.func @transform_1(%arg0: i32, %arg1: i32) -> (i32, i32) {
    %c0_i32 = arith.constant 0 : i32
    %c0_i32_0 = arith.constant 0 : i32
    return %c0_i32, %arg1 : i32, i32
  }
  func.func @transform_2(%arg0: i32, %arg1: i32) -> (i32, i32) {
    %c0_i32 = arith.constant 0 : i32
    %c0_i32_0 = arith.constant 0 : i32
    return %c0_i32, %arg1 : i32, i32
  }
  func.func @transform_3(%arg0: i32, %arg1: i32) -> (i32, i32) {
    %c0_i32 = arith.constant 0 : i32
    %c0_i32_0 = arith.constant 0 : i32
    return %arg1, %c0_i32 : i32, i32
  }
  func.func @transform_4(%arg0: i32, %arg1: i32) -> (i32, i32) {
    %c0_i32 = arith.constant 0 : i32
    %c0_i32_0 = arith.constant 0 : i32
    %c0_i32_1 = arith.constant 0 : i32
    return %c0_i32, %c0_i32_0 : i32, i32
  }
  func.func @transform_5(%arg0: i32, %arg1: i32) -> (i32, i32) {
    %c0_i32 = arith.constant 0 : i32
    %c0_i32_0 = arith.constant 0 : i32
    %c0_i32_1 = arith.constant 0 : i32
    return %c0_i32, %c0_i32_0 : i32, i32
  }
  func.func @transform_6(%arg0: i32, %arg1: i32) -> (i32, i32) {
    %c0_i32 = arith.constant 0 : i32
    %c0_i32_0 = arith.constant 0 : i32
    %c0_i32_1 = arith.constant 0 : i32
    return %c0_i32, %c0_i32_0 : i32, i32
  }
  func.func @transform_7(%arg0: i32, %arg1: i32) -> (i32, i32) {
    %c0_i32 = arith.constant 0 : i32
    %c0_i32_0 = arith.constant 0 : i32
    return %arg0, %c0_i32 : i32, i32
  }
}

</mosaic_0001>

<llo_original>
// kernel: tpu_custom_call.1
$region0: #{tpu_custom_call.1}
  #allocation0 [shape = 'u32[]', space=smem, size = 0x4, offset = 0x4, fixed_abs, tag = 'smem constant byte address 0x4 - core index']
  #allocation1 [shape = 'u32[144,128]{1,0:T(1,128)}', space=vmem, size = 0x12000, scoped, tag = 'internal scratch']
  #allocation2 [shape = 'f32[8,32]{1,0:T(8,128)}', space=vmem, size = 0x1000, scoped, tag = 'scratch operand']
  %s0 = inlined_call_operand.vmem [shape: f32[16,32], index: 0, kind: input, shape index: {}]
  %s1 = inlined_call_operand.vmem [shape: f32[32,64], index: 1, kind: input, shape index: {}]
  %s2 = inlined_call_operand.vmem [shape: f32[1,64], index: 2, kind: input, shape index: {}]
  %s3 = inlined_call_operand.vmem [shape: f32[64,32], index: 3, kind: input, shape index: {}]
  %s4 = inlined_call_operand.vmem [shape: f32[1,32], index: 4, kind: input, shape index: {}]
  %s5 = inlined_call_operand.vmem [shape: f32[1,32], index: 5, kind: input, shape index: {}]
  %s6 = inlined_call_operand.vmem [shape: f32[1,32], index: 6, kind: input, shape index: {}]
  %s7 = inlined_call_operand.hbm [shape: f32[16,32], index: 7, kind: output, shape index: {}]
  %s8 = sld [smem:[#allocation0]]
  $region73: #{tpu_custom_call.1} parent=0
    _
  %s10 = ssub.s32 1, %s8
  %s11 = scalar_select 0, %s10, %s8
  $region1: #{tpu_custom_call.1} parent=0
    #allocation3 [shape = 'u8[8192]{0}', space=vmem, size = 0x2000, scoped, tag = 'output window, operand 0']
    #allocation4 [shape = 's32[2]{0}', space=sflag, size = 0x8, scoped, tag = 'scoped memory for tpu_custom_call.1']
    %12 = vsyncpa [#allocation4], 0
    %s13 = scalar_lea.sflag [#allocation4], 1
    %14 = vsyncpa %s13, 0
    loop: start=0, step=1, limit=4
    $region2: #{tpu_custom_call.1} parent=1 // loop_pre_header
      _
    $region3: #{tpu_custom_call.1} parent=1 // loop_header
      %s16 = sphi 0, %s20
      %p17 = scmp.ge.s32.totalorder %s16, 4
      %s23 = sphi 0, %s35
      %s24 = sphi 0, %s31
      %s25 = sphi 0, %s23
      %s26 = sphi 0, %s24
      %s27 = sphi 0, %s25
      %s28 = sphi 0, %s26
      %s38 = sphi 0, %s40
      %s41 = sphi 0, %s38
      %s42 = sphi 0, %s41
      %s58 = sphi 0, %s42
      %s64 = sphi 0, %s66
      %s67 = sphi 0, %s64
      %s68 = sphi 0, %s67
      %s84 = sphi 0, %s68
      %s90 = sphi 0, %s92
      %s93 = sphi 0, %s90
      %s94 = sphi 0, %s93
      %s110 = sphi 0, %s94
      %s116 = sphi 0, %s118
      %s119 = sphi 0, %s116
      %s120 = sphi 0, %s119
      %s136 = sphi 0, %s120
      %s140 = sphi 0, %s140
      %s142 = sphi 0, %s140
      %s143 = sphi 0, %s142
      %s157 = sphi 0, %s143
      %s161 = sphi 0, %s161
      %s163 = sphi 0, %s161
      %s164 = sphi 0, %s163
      %s178 = sphi 0, %s164
      %s182 = sphi 0, %s182
      %s184 = sphi 0, %s182
      %s185 = sphi 0, %s184
      %s199 = sphi 0, %s185
      %s205 = sphi 0, %s207
      %s208 = sphi 0, %s205
      %s209 = sphi 0, %s208
      %s225 = sphi 0, %s209
    $region4: #{tpu_custom_call.1} parent=1 // loop_header_branch
      %19 = sbr.rel (%p17) target = $region8
    $region5: #{tpu_custom_call.1} parent=1 // loop_body
      %s21 = ssub.s32 %s16, 1
      %s22 = ssub.s32 %s16, 2
      %s29 = sadd.s32 1, %s24
      %p30 = scmp.ge.s32.totalorder %s29, 1
      %s31 = scalar_select %p30, 0, %s29
      %s32 = sadd.s32 1, %s23
      %s33 = scalar_select %p30, %s32, %s23
      %p34 = scmp.ge.s32.totalorder %s33, 2
      %s35 = scalar_select %p34, 0, %s33
      %s36 = ssub.s32 %s23, %s35
      %p37 = scmp.eq.s32.totalorder %s36, 0
      %s39 = sadd.s32 %s38, 1
      %s40 = scalar_select %p37, %s38, %s39
      %p43 = pneg %p37
      %p44 = scmp.eq.s32.totalorder %s16, 1
      %p45 = por %p43, %p44
      %p46 = scmp.ne.s32.totalorder %s38, %s41
      %p47 = scmp.eq.s32.totalorder %s16, 0
      %p48 = por %p46, %p47
      %p49 = scmp.ne.s32.totalorder %s38, %s41
      %p50 = scmp.eq.s32.totalorder %s21, 1
      %p51 = por %p49, %p50
      %p52 = scmp.ne.s32.totalorder %s41, %s42
      %p53 = scmp.eq.s32.totalorder %s21, 0
      %p54 = por %p52, %p53
      %p55 = scmp.ne.s32.totalorder %s41, %s42
      %p56 = scmp.eq.s32.totalorder %s22, 1
      %p57 = por %p55, %p56
      %p59 = scmp.ne.s32.totalorder %s42, %s58
      %p60 = scmp.eq.s32.totalorder %s22, 0
      %p61 = por %p59, %p60
      %s62 = ssub.s32 %s24, %s31
      %p63 = scmp.eq.s32.totalorder %s62, 0
      %s65 = sadd.s32 %s64, 1
      %s66 = scalar_select %p63, %s64, %s65
      %p69 = pneg %p63
      %p70 = scmp.eq.s32.totalorder %s16, 1
      %p71 = por %p69, %p70
      %p72 = scmp.ne.s32.totalorder %s64, %s67
      %p73 = scmp.eq.s32.totalorder %s16, 0
      %p74 = por %p72, %p73
      %p75 = scmp.ne.s32.totalorder %s64, %s67
      %p76 = scmp.eq.s32.totalorder %s21, 1
      %p77 = por %p75, %p76
      %p78 = scmp.ne.s32.totalorder %s67, %s68
      %p79 = scmp.eq.s32.totalorder %s21, 0
      %p80 = por %p78, %p79
      %p81 = scmp.ne.s32.totalorder %s67, %s68
      %p82 = scmp.eq.s32.totalorder %s22, 1
      %p83 = por %p81, %p82
      %p85 = scmp.ne.s32.totalorder %s68, %s84
      %p86 = scmp.eq.s32.totalorder %s22, 0
      %p87 = por %p85, %p86
      %s88 = ssub.s32 %s24, %s31
      %p89 = scmp.eq.s32.totalorder %s88, 0
      %s91 = sadd.s32 %s90, 1
      %s92 = scalar_select %p89, %s90, %s91
      %p95 = pneg %p89
      %p96 = scmp.eq.s32.totalorder %s16, 1
      %p97 = por %p95, %p96
      %p98 = scmp.ne.s32.totalorder %s90, %s93
      %p99 = scmp.eq.s32.totalorder %s16, 0
      %p100 = por %p98, %p99
      %p101 = scmp.ne.s32.totalorder %s90, %s93
      %p102 = scmp.eq.s32.totalorder %s21, 1
      %p103 = por %p101, %p102
      %p104 = scmp.ne.s32.totalorder %s93, %s94
      %p105 = scmp.eq.s32.totalorder %s21, 0
      %p106 = por %p104, %p105
      %p107 = scmp.ne.s32.totalorder %s93, %s94
      %p108 = scmp.eq.s32.totalorder %s22, 1
      %p109 = por %p107, %p108
      %p111 = scmp.ne.s32.totalorder %s94, %s110
      %p112 = scmp.eq.s32.totalorder %s22, 0
      %p113 = por %p111, %p112
      %s114 = ssub.s32 %s24, %s31
      %p115 = scmp.eq.s32.totalorder %s114, 0
      %s117 = sadd.s32 %s116, 1
      %s118 = scalar_select %p115, %s116, %s117
      %p121 = pneg %p115
      %p122 = scmp.eq.s32.totalorder %s16, 1
      %p123 = por %p121, %p122
      %p124 = scmp.ne.s32.totalorder %s116, %s119
      %p125 = scmp.eq.s32.totalorder %s16, 0
      %p126 = por %p124, %p125
      %p127 = scmp.ne.s32.totalorder %s116, %s119
      %p128 = scmp.eq.s32.totalorder %s21, 1
      %p129 = por %p127, %p128
      %p130 = scmp.ne.s32.totalorder %s119, %s120
      %p131 = scmp.eq.s32.totalorder %s21, 0
      %p132 = por %p130, %p131
      %p133 = scmp.ne.s32.totalorder %s119, %s120
      %p134 = scmp.eq.s32.totalorder %s22, 1
      %p135 = por %p133, %p134
      %p137 = scmp.ne.s32.totalorder %s120, %s136
      %p138 = scmp.eq.s32.totalorder %s22, 0
      %p139 = por %p137, %p138
      %s141 = sadd.s32 %s140, 1
      %p144 = scmp.eq.s32.totalorder %s16, 1
      %p145 = scmp.ne.s32.totalorder %s140, %s142
      %p146 = scmp.eq.s32.totalorder %s16, 0
      %p147 = por %p145, %p146
      %p148 = scmp.ne.s32.totalorder %s140, %s142
      %p149 = scmp.eq.s32.totalorder %s21, 1
      %p150 = por %p148, %p149
      %p151 = scmp.ne.s32.totalorder %s142, %s143
      %p152 = scmp.eq.s32.totalorder %s21, 0
      %p153 = por %p151, %p152
      %p154 = scmp.ne.s32.totalorder %s142, %s143
      %p155 = scmp.eq.s32.totalorder %s22, 1
      %p156 = por %p154, %p155
      %p158 = scmp.ne.s32.totalorder %s143, %s157
      %p159 = scmp.eq.s32.totalorder %s22, 0
      %p160 = por %p158, %p159
      %s162 = sadd.s32 %s161, 1
      %p165 = scmp.eq.s32.totalorder %s16, 1
      %p166 = scmp.ne.s32.totalorder %s161, %s163
      %p167 = scmp.eq.s32.totalorder %s16, 0
      %p168 = por %p166, %p167
      %p169 = scmp.ne.s32.totalorder %s161, %s163
      %p170 = scmp.eq.s32.totalorder %s21, 1
      %p171 = por %p169, %p170
      %p172 = scmp.ne.s32.totalorder %s163, %s164
      %p173 = scmp.eq.s32.totalorder %s21, 0
      %p174 = por %p172, %p173
      %p175 = scmp.ne.s32.totalorder %s163, %s164
      %p176 = scmp.eq.s32.totalorder %s22, 1
      %p177 = por %p175, %p176
      %p179 = scmp.ne.s32.totalorder %s164, %s178
      %p180 = scmp.eq.s32.totalorder %s22, 0
      %p181 = por %p179, %p180
      %s183 = sadd.s32 %s182, 1
      %p186 = scmp.eq.s32.totalorder %s16, 1
      %p187 = scmp.ne.s32.totalorder %s182, %s184
      %p188 = scmp.eq.s32.totalorder %s16, 0
      %p189 = por %p187, %p188
      %p190 = scmp.ne.s32.totalorder %s182, %s184
      %p191 = scmp.eq.s32.totalorder %s21, 1
      %p192 = por %p190, %p191
      %p193 = scmp.ne.s32.totalorder %s184, %s185
      %p194 = scmp.eq.s32.totalorder %s21, 0
      %p195 = por %p193, %p194
      %p196 = scmp.ne.s32.totalorder %s184, %s185
      %p197 = scmp.eq.s32.totalorder %s22, 1
      %p198 = por %p196, %p197
      %p200 = scmp.ne.s32.totalorder %s185, %s199
      %p201 = scmp.eq.s32.totalorder %s22, 0
      %p202 = por %p200, %p201
      %s203 = ssub.s32 %s23, %s35
      %p204 = scmp.eq.s32.totalorder %s203, 0
      %s206 = sadd.s32 %s205, 1
      %s207 = scalar_select %p204, %s205, %s206
      %p210 = pneg %p204
      %p211 = scmp.eq.s32.totalorder %s16, 1
      %p212 = por %p210, %p211
      %p213 = scmp.ne.s32.totalorder %s205, %s208
      %p214 = scmp.eq.s32.totalorder %s16, 0
      %p215 = por %p213, %p214
      %p216 = scmp.ne.s32.totalorder %s205, %s208
      %p217 = scmp.eq.s32.totalorder %s21, 1
      %p218 = por %p216, %p217
      %p219 = scmp.ne.s32.totalorder %s208, %s209
      %p220 = scmp.eq.s32.totalorder %s21, 0
      %p221 = por %p219, %p220
      %p222 = scmp.ne.s32.totalorder %s208, %s209
      %p223 = scmp.eq.s32.totalorder %s22, 1
      %p224 = por %p222, %p223
      %p226 = scmp.ne.s32.totalorder %s209, %s225
      %p227 = scmp.eq.s32.totalorder %s22, 0
      %p228 = por %p226, %p227
      %p229 = scmp.le.s32.totalorder 1, %s16
      %p230 = scmp.lt.s32.totalorder %s16, 3
      %p231 = pnand %p229, %p230
      %p232 = pneg %p231
      // Predicated region
      $region9: #{tpu_custom_call.1} parent=5 // pred_check
        _
      $region10: #{tpu_custom_call.1} parent=5 // pred_check_branch
        %234 = sbr.rel (%p231) target = $region12
      $region11: #{tpu_custom_call.1} parent=5 // pred_region
        %s235 = ssub.s32 %s16, 1
        // Predicated region
        $region13: #{tpu_custom_call.1} parent=11 // pred_check
          %p236 = pneg %p80
        $region14: #{tpu_custom_call.1} parent=11 // pred_check_branch
          %238 = sbr.rel (%p236) target = $region16
        $region15: #{tpu_custom_call.1} parent=11 // pred_region
          %p239 = scmp.lt.s32.totalorder %s26, 0
          %s240 = scalar_select %p239, %s26, 0
          %s241 = smul.addr %s240, 8
          %s242 = scalar_lea.vmem %s1, %s241
        $region16: #{tpu_custom_call.1} parent=11 // pred_fallthru
          _
        // Predicated region
        $region17: #{tpu_custom_call.1} parent=11 // pred_check
          %p243 = pneg %p106
        $region18: #{tpu_custom_call.1} parent=11 // pred_check_branch
          %245 = sbr.rel (%p243) target = $region20
        $region19: #{tpu_custom_call.1} parent=11 // pred_region
          %p246 = scmp.lt.s32.totalorder %s26, 0
          %s247 = scalar_select %p246, %s26, 0
          %s248 = scalar_lea.vmem %s2, %s247
        $region20: #{tpu_custom_call.1} parent=11 // pred_fallthru
          _
        // Predicated region
        $region21: #{tpu_custom_call.1} parent=11 // pred_check
          %p249 = pneg %p132
        $region22: #{tpu_custom_call.1} parent=11 // pred_check_branch
          %251 = sbr.rel (%p249) target = $region24
        $region23: #{tpu_custom_call.1} parent=11 // pred_region
          %s252 = smul.u32 8, %s26
          %p253 = scmp.lt.s32.totalorder %s252, 7
          %s254 = scalar_select %p253, %s252, 7
          %s255 = smul.addr %s254, 8
          %s256 = scalar_lea.vmem %s3, %s255
          %s257 = smul.u32 8, %s26
        $region24: #{tpu_custom_call.1} parent=11 // pred_fallthru
          _
        // Predicated region
        $region25: #{tpu_custom_call.1} parent=11 // pred_check
          %p258 = pneg %p153
        $region26: #{tpu_custom_call.1} parent=11 // pred_check_branch
          %260 = sbr.rel (%p258) target = $region28
        $region27: #{tpu_custom_call.1} parent=11 // pred_region
          _
        $region28: #{tpu_custom_call.1} parent=11 // pred_fallthru
          _
        // Predicated region
        $region29: #{tpu_custom_call.1} parent=11 // pred_check
          %p261 = pneg %p174
        $region30: #{tpu_custom_call.1} parent=11 // pred_check_branch
          %263 = sbr.rel (%p261) target = $region32
        $region31: #{tpu_custom_call.1} parent=11 // pred_region
          _
        $region32: #{tpu_custom_call.1} parent=11 // pred_fallthru
          _
        // Predicated region
        $region33: #{tpu_custom_call.1} parent=11 // pred_check
          %p264 = pneg %p195
        $region34: #{tpu_custom_call.1} parent=11 // pred_check_branch
          %266 = sbr.rel (%p264) target = $region36
        $region35: #{tpu_custom_call.1} parent=11 // pred_region
          _
        $region36: #{tpu_custom_call.1} parent=11 // pred_fallthru
          _
      $region12: #{tpu_custom_call.1} parent=5 // pred_fallthru
        _
      %p267 = scmp.lt.s32.totalorder %s16, 2
      // Predicated region
      $region37: #{tpu_custom_call.1} parent=5 // pred_check
        %p268 = pneg %p267
      $region38: #{tpu_custom_call.1} parent=5 // pred_check_branch
        %270 = sbr.rel (%p268) target = $region40
      $region39: #{tpu_custom_call.1} parent=5 // pred_region
        // Predicated region
        $region41: #{tpu_custom_call.1} parent=39 // pred_check
          %p271 = pneg %p48
        $region42: #{tpu_custom_call.1} parent=39 // pred_check_branch
          %273 = sbr.rel (%p271) target = $region44
        $region43: #{tpu_custom_call.1} parent=39 // pred_region
          %p274 = scmp.lt.s32.totalorder %s23, 1
          %s275 = scalar_select %p274, %s23, 1
          %s276 = smul.addr %s275, 8
          %s277 = scalar_lea.vmem %s0, %s276
        $region44: #{tpu_custom_call.1} parent=39 // pred_fallthru
          _
      $region40: #{tpu_custom_call.1} parent=5 // pred_fallthru
        _
      %p278 = scmp.le.s32.totalorder 1, %s16
      %p279 = scmp.lt.s32.totalorder %s16, 3
      %p280 = pnand %p278, %p279
      %p281 = pneg %p280
      // Predicated region
      $region45: #{tpu_custom_call.1} parent=5 // pred_check
        _
      $region46: #{tpu_custom_call.1} parent=5 // pred_check_branch
        %283 = sbr.rel (%p280) target = $region48
      $region47: #{tpu_custom_call.1} parent=5 // pred_region
        %s284 = ssub.s32 %s16, 1
        %p285 = scmp.lt.s32.totalorder %s25, 1
        %s286 = scalar_select %p285, %s25, 1
        %s287 = smul.addr %s286, 8
        %s288 = scalar_lea.vmem %s0, %s287
        %p289 = pneg %p54
        %p290 = pneg %p51
        %p291 = scmp.lt.s32.totalorder %s26, 0
        %s292 = scalar_select %p291, %s26, 0
        %s293 = smul.addr %s292, 8
        %s294 = scalar_lea.vmem %s1, %s293
        %p295 = pneg %p80
        %p296 = pneg %p77
        %p297 = scmp.lt.s32.totalorder %s26, 0
        %s298 = scalar_select %p297, %s26, 0
        %s299 = scalar_lea.vmem %s2, %s298
        %p300 = pneg %p106
        %p301 = pneg %p103
        %s302 = smul.u32 8, %s26
        %p303 = scmp.lt.s32.totalorder %s302, 7
        %s304 = scalar_select %p303, %s302, 7
        %s305 = smul.addr %s304, 8
        %s306 = scalar_lea.vmem %s3, %s305
        %p307 = pneg %p132
        %p308 = pneg %p129
        %p309 = pneg %p153
        %p310 = pneg %p150
        %p311 = pneg %p174
        %p312 = pneg %p171
        %p313 = pneg %p195
        %p314 = pneg %p192
        %p315 = pneg %p221
        %p316 = pneg %p218
        %s317 = sand.u32 %s208, 1
        %s318 = scalar_lea.sflag [#allocation4], %s317
        %s319 = sand.u32 %s208, 1
        %s320 = smul.addr %s319, 8
        %s321 = scalar_lea.vmem [#allocation3], %s320
        %p322 = scmp.lt.s32.totalorder %s25, 1
        %s323 = scalar_select %p322, %s25, 1
        %s324 = smul.addr %s323, 8
        %s325 = scalar_lea.vmem %s0, %s324
        %p326 = scmp.lt.s32.totalorder %s26, 0
        %s327 = scalar_select %p326, %s26, 0
        %s328 = smul.addr %s327, 8
        %s329 = scalar_lea.vmem %s1, %s328
        %p330 = scmp.lt.s32.totalorder %s26, 0
        %s331 = scalar_select %p330, %s26, 0
        %s332 = scalar_lea.vmem %s2, %s331
        %s333 = smul.u32 8, %s26
        %p334 = scmp.lt.s32.totalorder %s333, 7
        %s335 = scalar_select %p334, %s333, 7
        %s336 = smul.addr %s335, 8
        %s337 = scalar_lea.vmem %s3, %s336
        %s338 = smul.u32 8, %s26
        %v339 = vld [vmem:[%s325] sm:$0xff]
        %v340 = vld [vmem:[%s329] sm:$0xff]
        %v341 = vld [vmem:[%s329 + $0x8] sm:$0xff]
        %v342 = vld [vmem:[%s329 + $0x10] sm:$0xff]
        %v343 = vld [vmem:[%s329 + $0x18] sm:$0xff]
        %v344 = vld [vmem:[%s332] sm:$0x1]
        %v346 = vlaneseq
        %v347 = vshrl.u32 %v346, 7
        %v348 = vsub.s32 0, %v347
        %v349 = vrot.slane %v344, %v348
        %vm351 = vcmask 261120
        %v353 = vsel %vm351, %v339, 0
        %355 = vmatprep.subr.mxu0 0.0
        %356 = vmatpush1.msra.mxu0 0.0
        %357 = vmatprep.subr.mxu0 0.0
        %358 = vmatpush1.msra.mxu0 0.0
        %359 = vmatprep.subr.mxu0 0.0
        %360 = vmatpush1.msra.mxu0 0.0
        %361 = vmatprep.subr.mxu0 0.0
        %362 = vmatpush1.msra.mxu0 0.0
        %363 = vmatprep.subr.mxu0 0.0
        %364 = vmatpush1.msra.mxu0 0.0
        %365 = vmatprep.subr.mxu0 0.0
        %366 = vmatpush1.msra.mxu0 0.0
        %367 = vmatprep.subr.mxu0 0.0
        %368 = vmatpush1.msra.mxu0 0.0
        %369 = vmatprep.subr.mxu0 0.0
        %370 = vmatpush1.msra.mxu0 0.0
        %371 = vmatprep.subr.mxu0 0.0
        %372 = vmatpush1.msra.mxu0 0.0
        %373 = vmatprep.subr.mxu0 0.0
        %374 = vmatpush1.msra.mxu0 0.0
        %375 = vmatprep.subr.mxu0 0.0
        %376 = vmatpush1.msra.mxu0 0.0
        %377 = vmatprep.subr.mxu0 0.0
        %378 = vmatpush1.msra.mxu0 0.0
        %379 = vmatprep.subr.mxu0 0.0
        %380 = vmatpush1.msra.mxu0 %v343
        %381 = vmatprep.subr.mxu0 0.0
        %382 = vmatpush1.msra.mxu0 %v342
        %383 = vmatprep.subr.mxu0 0.0
        %384 = vmatpush1.msra.mxu0 %v341
        %385 = vmatprep.subr.mxu0 0.0
        %386 = vmatpush1.msra.mxu0 %v340
        %387 = vmatprep.subr.mxu0 0.0
        %388 = vmatpush2.msra.mxu0 0.0
        %389 = vmatprep.subr.mxu0 0.0
        %390 = vmatpush2.msra.mxu0 0.0
        %391 = vmatprep.subr.mxu0 0.0
        %392 = vmatpush2.msra.mxu0 0.0
        %393 = vmatprep.subr.mxu0 0.0
        %394 = vmatpush2.msra.mxu0 0.0
        %395 = vmatprep.subr.mxu0 0.0
        %396 = vmatpush2.msra.mxu0 0.0
        %397 = vmatprep.subr.mxu0 0.0
        %398 = vmatpush2.msra.mxu0 0.0
        %399 = vmatprep.subr.mxu0 0.0
        %400 = vmatpush2.msra.mxu0 0.0
        %401 = vmatprep.subr.mxu0 0.0
        %402 = vmatpush2.msra.mxu0 0.0
        %403 = vmatprep.subr.mxu0 0.0
        %404 = vmatpush2.msra.mxu0 0.0
        %405 = vmatprep.subr.mxu0 0.0
        %406 = vmatpush2.msra.mxu0 0.0
        %407 = vmatprep.subr.mxu0 0.0
        %408 = vmatpush2.msra.mxu0 0.0
        %409 = vmatprep.subr.mxu0 0.0
        %410 = vmatpush2.msra.mxu0 0.0
        %411 = vmatprep.subr.mxu0 0.0
        %412 = vmatpush2.msra.mxu0 0.0
        %413 = vmatprep.subr.mxu0 0.0
        %414 = vmatpush2.msra.mxu0 0.0
        %415 = vmatprep.subr.mxu0 0.0
        %416 = vmatpush2.msra.mxu0 0.0
        %417 = vmatprep.subr.mxu0 0.0
        %418 = vmatpush2.msra.mxu0 0.0
        %419 = vmatprep.mubr.f32.mxu0 0.0
        %420 = vmatmul.mubr.f32.gmra.mxu0 %v353
        %v421 = vpop.f32.mrf.mxu0
        %v422 = vadd.f32 %v349, %v421
        %v423 = vpop.f32.mrf.mxu0
        %424 = vdwg.mxu0
        %v425 = vmax.f32 %v422, 0.0
        %v426 = vld [vmem:[%s337] sm:$0xff]
        %v427 = vld [vmem:[%s337 + $0x8] sm:$0xff]
        %v428 = vld [vmem:[%s337 + $0x10] sm:$0xff]
        %v429 = vld [vmem:[%s337 + $0x18] sm:$0xff]
        %v430 = vld [vmem:[%s337 + $0x20] sm:$0xff]
        %v431 = vld [vmem:[%s337 + $0x28] sm:$0xff]
        %v432 = vld [vmem:[%s337 + $0x30] sm:$0xff]
        %v433 = vld [vmem:[%s337 + $0x38] sm:$0xff]
        %vm434 = vcmask 523264
        %v436 = vsel %vm434, %v425, 0
        %438 = vmatprep.subr.mxu0 0.0
        %439 = vmatpush1.msra.mxu0 0.0
        %440 = vmatprep.subr.mxu0 0.0
        %441 = vmatpush1.msra.mxu0 0.0
        %442 = vmatprep.subr.mxu0 0.0
        %443 = vmatpush1.msra.mxu0 0.0
        %444 = vmatprep.subr.mxu0 0.0
        %445 = vmatpush1.msra.mxu0 0.0
        %446 = vmatprep.subr.mxu0 0.0
        %447 = vmatpush1.msra.mxu0 0.0
        %448 = vmatprep.subr.mxu0 0.0
        %449 = vmatpush1.msra.mxu0 0.0
        %450 = vmatprep.subr.mxu0 0.0
        %451 = vmatpush1.msra.mxu0 0.0
        %452 = vmatprep.subr.mxu0 0.0
        %453 = vmatpush1.msra.mxu0 0.0
        %454 = vmatprep.subr.mxu0 0.0
        %455 = vmatpush1.msra.mxu0 %v433
        %456 = vmatprep.subr.mxu0 0.0
        %457 = vmatpush1.msra.mxu0 %v432
        %458 = vmatprep.subr.mxu0 0.0
        %459 = vmatpush1.msra.mxu0 %v431
        %460 = vmatprep.subr.mxu0 0.0
        %461 = vmatpush1.msra.mxu0 %v430
        %462 = vmatprep.subr.mxu0 0.0
        %463 = vmatpush1.msra.mxu0 %v429
        %464 = vmatprep.subr.mxu0 0.0
        %465 = vmatpush1.msra.mxu0 %v428
        %466 = vmatprep.subr.mxu0 0.0
        %467 = vmatpush1.msra.mxu0 %v427
        %468 = vmatprep.subr.mxu0 0.0
        %469 = vmatpush1.msra.mxu0 %v426
        %470 = vmatprep.subr.mxu0 0.0
        %471 = vmatpush2.msra.mxu0 0.0
        %472 = vmatprep.subr.mxu0 0.0
        %473 = vmatpush2.msra.mxu0 0.0
        %474 = vmatprep.subr.mxu0 0.0
        %475 = vmatpush2.msra.mxu0 0.0
        %476 = vmatprep.subr.mxu0 0.0
        %477 = vmatpush2.msra.mxu0 0.0
        %478 = vmatprep.subr.mxu0 0.0
        %479 = vmatpush2.msra.mxu0 0.0
        %480 = vmatprep.subr.mxu0 0.0
        %481 = vmatpush2.msra.mxu0 0.0
        %482 = vmatprep.subr.mxu0 0.0
        %483 = vmatpush2.msra.mxu0 0.0
        %484 = vmatprep.subr.mxu0 0.0
        %485 = vmatpush2.msra.mxu0 0.0
        %486 = vmatprep.subr.mxu0 0.0
        %487 = vmatpush2.msra.mxu0 0.0
        %488 = vmatprep.subr.mxu0 0.0
        %489 = vmatpush2.msra.mxu0 0.0
        %490 = vmatprep.subr.mxu0 0.0
        %491 = vmatpush2.msra.mxu0 0.0
        %492 = vmatprep.subr.mxu0 0.0
        %493 = vmatpush2.msra.mxu0 0.0
        %494 = vmatprep.subr.mxu0 0.0
        %495 = vmatpush2.msra.mxu0 0.0
        %496 = vmatprep.subr.mxu0 0.0
        %497 = vmatpush2.msra.mxu0 0.0
        %498 = vmatprep.subr.mxu0 0.0
        %499 = vmatpush2.msra.mxu0 0.0
        %500 = vmatprep.subr.mxu0 0.0
        %501 = vmatpush2.msra.mxu0 0.0
        %502 = vmatprep.mubr.f32.mxu0 0.0
        %503 = vmatmul.mubr.f32.gmra.mxu0 %v436
        %v504 = vpop.f32.mrf.mxu0
        %v505 = vadd.f32 0.0, %v504
        %v506 = vpop.f32.mrf.mxu0
        %507 = vdwg.mxu0
        %p508 = scmp.eq.s32.totalorder %s26, 0
        // Predicated region
        $region49: #{tpu_custom_call.1} parent=47 // pred_check
          %p509 = pneg %p508
        $region50: #{tpu_custom_call.1} parent=47 // pred_check_branch
          %511 = sbr.rel (%p509) target = $region52
        $region51: #{tpu_custom_call.1} parent=47 // pred_region
          %512 = vst.msk [vmem:[#allocation2] sm:$0xff] %vm351, %v505
        $region52: #{tpu_custom_call.1} parent=47 // pred_fallthru
          _
        %p513 = scmp.ne.s32.totalorder %s26, 0
        // Predicated region
        $region53: #{tpu_custom_call.1} parent=47 // pred_check
          %p514 = pneg %p513
        $region54: #{tpu_custom_call.1} parent=47 // pred_check_branch
          %516 = sbr.rel (%p514) target = $region56
        $region55: #{tpu_custom_call.1} parent=47 // pred_region
          %v517 = vld [vmem:[#allocation2] sm:$0xff]
          %v518 = vadd.f32 %v517, %v505
          %519 = vst.msk [vmem:[#allocation2] sm:$0xff] %vm351, %v518
        $region56: #{tpu_custom_call.1} parent=47 // pred_fallthru
          _
        // Predicated region
        $region57: #{tpu_custom_call.1} parent=47 // pred_check
          %p520 = pneg %p508
        $region58: #{tpu_custom_call.1} parent=47 // pred_check_branch
          %522 = sbr.rel (%p520) target = $region60
        $region59: #{tpu_custom_call.1} parent=47 // pred_region
          %v523 = vld [vmem:[#allocation2] sm:$0xff]
          %v524 = vld [vmem:[%s4] sm:$0x1]
          %v526 = vlaneseq
          %v527 = vshrl.u32 %v526, 7
          %v528 = vsub.s32 0, %v527
          %v529 = vrot.slane %v524, %v528
          %v531 = vadd.f32 %v523, %v529
          %v532 = vadd.f32 %v531, %v339
          %v533 = vsel %vm351, %v532, 0.0
          %534 = vadd.xlane.f32.xlu0 %v533
          %v535 = vpop.xlane.xlu0 %534
          %v536 = vrcp.pop 32.0
          %v537 = vmul.f32 %v535, %v536
          %v538 = vsub.f32 %v532, %v537
          %v539 = vmul.f32 %v538, %v538
          %v540 = vsel %vm351, %v539, 0.0
          %541 = vadd.xlane.f32.xlu0 %v540
          %v542 = vpop.xlane.xlu0 %541
          %v543 = vmul.f32 %v542, %v536
          %v544 = vadd.f32 %v543, 1e-06
          %v545 = vrsqrt.pop %v544
          %v546 = vmul.f32 %v538, %v545
          %v547 = vld [vmem:[%s5] sm:$0x1]
          %v549 = vlaneseq
          %v550 = vshrl.u32 %v549, 7
          %v551 = vsub.s32 0, %v550
          %v552 = vrot.slane %v547, %v551
          %v554 = vmul.f32 %v546, %v552
          %v555 = vld [vmem:[%s6] sm:$0x1]
          %v557 = vlaneseq
          %v558 = vshrl.u32 %v557, 7
          %v559 = vsub.s32 0, %v558
          %v560 = vrot.slane %v555, %v559
          %v562 = vadd.f32 %v554, %v560
          %563 = vst.msk [vmem:[%s321] sm:$0xff] %vm351, %v562
        $region60: #{tpu_custom_call.1} parent=47 // pred_fallthru
          _
        %s564 = sand.u32 %s208, 1
        %s565 = scalar_lea.sflag [#allocation4], %s564
        %s566 = sand.u32 %s208, 1
        %s567 = smul.addr %s566, 8
        %s568 = scalar_lea.vmem [#allocation3], %s567
        // Predicated region
        $region61: #{tpu_custom_call.1} parent=47 // pred_check
          %p569 = pneg %p218
        $region62: #{tpu_custom_call.1} parent=47 // pred_check_branch
          %571 = sbr.rel (%p569) target = $region64
        $region63: #{tpu_custom_call.1} parent=47 // pred_region
          %s573 = ssub.s32 128, 128
          %574 = vsyncadd %s565, %s573
          %s575 = smul.addr %s25, 128
          %s576 = scalar_lea.hbm %s7, %s575
          %s578 = sshll.u32 %s568, 4
          %s579 = int_to_ptr.vmem [resolvable:$true] %s578
          %581 = dma.vmem_to_hbm [thread:$0]  %s579, 128, %s576, %s565
        $region64: #{tpu_custom_call.1} parent=47 // pred_fallthru
          _
      $region48: #{tpu_custom_call.1} parent=5 // pred_fallthru
        _
      %p582 = scmp.le.s32.totalorder 2, %s16
      // Predicated region
      $region65: #{tpu_custom_call.1} parent=5 // pred_check
        %p583 = pneg %p582
      $region66: #{tpu_custom_call.1} parent=5 // pred_check_branch
        %585 = sbr.rel (%p583) target = $region68
      $region67: #{tpu_custom_call.1} parent=5 // pred_region
        %s586 = ssub.s32 %s16, 2
        // Predicated region
        $region69: #{tpu_custom_call.1} parent=67 // pred_check
          %p587 = pneg %p224
        $region70: #{tpu_custom_call.1} parent=67 // pred_check_branch
          %589 = sbr.rel (%p587) target = $region72
        $region71: #{tpu_custom_call.1} parent=67 // pred_region
          %s590 = sand.u32 %s209, 1
          %s591 = scalar_lea.sflag [#allocation4], %s590
          %s592 = sand.u32 %s209, 1
          %s593 = smul.addr %s592, 8
          %s594 = scalar_lea.vmem [#allocation3], %s593
          %595 = dma.done %s591, 128
        $region72: #{tpu_custom_call.1} parent=67 // pred_fallthru
          _
      $region68: #{tpu_custom_call.1} parent=5 // pred_fallthru
        _
    $region6: #{tpu_custom_call.1} parent=1 // loop_footer
      %s20 = sadd.s32 1, %s16
    $region7: #{tpu_custom_call.1} parent=1 // loop_footer_branch
      %15 = sbr.rel target = $region3
    $region8: #{tpu_custom_call.1} parent=1 // loop_exit
      _
    %596 = vsyncpa [#allocation4], 1
    %s597 = scalar_lea.sflag [#allocation4], 1
    %598 = vsyncpa %s597, 1

</llo_original>
